<compile_context>
chip_gen: v6e
topology: v6e:2x2x1
jax: 0.10.0
libtpu: 0.0.40
codegen_flags: <defaults>
</compile_context>

<pallas_src>
import jax
import jax.numpy as jnp
from jax.experimental import pallas as pl
from jax.experimental.pallas import tpu as pltpu


# ----------------------------------------------------------------------------
# Fused kernel: 3 inner-model branches + CFG combine, single invocation
# ----------------------------------------------------------------------------
def _fused_cfg_kernel(scalars_ref,                        # SMEM (3,): [sigma, text_scale, image_scale]
                      z_ref, ccat_ref, ucat_ref,          # VMEM (C, HW)
                      ccross_ref, ucross_ref,             # VMEM (T, D)
                      wz_ref, wcat_ref,                   # VMEM (C, C)   conv weight, split
                      bc_ref, ws_ref, wt_ref,             # VMEM (C,1) (C,1) (C,D)
                      o_ref):                             # VMEM (C, HW)
    T = ccross_ref.shape[0]
    inv_t = 1.0 / T

    # 1x1 conv over the channel-concatenated input, decomposed as
    #   W @ [z ; c_concat] = W_z @ z + W_cat @ c_concat.
    # The z contribution is identical for all three CFG branches -> computed once.
    h_z = jnp.dot(wz_ref[...], z_ref[...],
                  preferred_element_type=jnp.float32)                 # (C, HW)
    h_ci = h_z + jnp.dot(wcat_ref[...], ccat_ref[...],
                         preferred_element_type=jnp.float32)          # branches 0,1
    h_un = h_z + jnp.dot(wcat_ref[...], ucat_ref[...],
                         preferred_element_type=jnp.float32)          # branch  2

    # Text conditioning: mean-pool the cross-attn context over T, then a small MXU
    # contraction (C,D)x(1,D)^T -> (C,1) per distinct context (cond / uncond).
    wt = wt_ref[...]                                                   # (C, D)
    mean_c = jnp.sum(ccross_ref[...], axis=0, keepdims=True) * inv_t   # (1, D)
    mean_u = jnp.sum(ucross_ref[...], axis=0, keepdims=True) * inv_t   # (1, D)
    t_c = jnp.einsum("cd,nd->cn", wt, mean_c,
                     preferred_element_type=jnp.float32)               # (C, 1)
    t_u = jnp.einsum("cd,nd->cn", wt, mean_u,
                     preferred_element_type=jnp.float32)               # (C, 1)

    # Scalars come from SMEM.
    sigma = scalars_ref[0]
    ts = scalars_ref[1]
    im = scalars_ref[2]

    base = bc_ref[...] + ws_ref[...] * sigma                           # (C, 1)

    out_cond = jnp.tanh(h_ci + base + t_c)                             # branch 0
    out_img = jnp.tanh(h_ci + base + t_u)                              # branch 1
    out_uncond = jnp.tanh(h_un + base + t_u)                           # branch 2

    # CFG combination, fused: only the final result is written back (lane-dense).
    o_ref[...] = (out_uncond
                  + ts * (out_cond - out_img)
                  + im * (out_img - out_uncond))


# ----------------------------------------------------------------------------
# CFGDenoiser.forward (thin JAX glue, hot path entirely in one Pallas call)
# ----------------------------------------------------------------------------
def cfg_denoiser_forward(z, sigma, cond, uncond,
                         text_cfg_scale, image_cfg_scale, params):
    # z: (1, C, H, W) NCHW (the module assumes batch 1: '1 ...'); sigma: (1,)
    _, C, H, W = z.shape
    HW = H * W
    _, T, D = cond["c_crossattn"][0].shape

    # [sigma, text_scale, image_scale] as SMEM scalars.
    scalars = jnp.concatenate([
        jnp.reshape(sigma, (1,)).astype(jnp.float32),
        jnp.asarray([text_cfg_scale, image_cfg_scale], dtype=jnp.float32),
    ])

    # Static split of the conv weight: z-half and concat-half.
    w_z = params["w_conv"][:, :C]
    w_cat = params["w_conv"][:, C:]

    vmem = pl.BlockSpec(memory_space=pltpu.MemorySpace.VMEM)
    out = pl.pallas_call(
        _fused_cfg_kernel,
        out_shape=jax.ShapeDtypeStruct((C, HW), jnp.float32),
        in_specs=[
            pl.BlockSpec(memory_space=pltpu.MemorySpace.SMEM),   # [sigma, ts, is]
            vmem,   # z
            vmem,   # cond   c_concat
            vmem,   # uncond c_concat
            vmem,   # cond   c_crossattn
            vmem,   # uncond c_crossattn
            vmem,   # W_conv (z half)
            vmem,   # W_conv (concat half)
            vmem,   # b_conv
            vmem,   # W_sigma
            vmem,   # W_txt
        ],
        out_specs=pl.BlockSpec(memory_space=pltpu.MemorySpace.VMEM),
    )(scalars,
      z.reshape(C, HW),
      cond["c_concat"][0].reshape(C, HW),
      uncond["c_concat"][0].reshape(C, HW),
      cond["c_crossattn"][0].reshape(T, D),
      uncond["c_crossattn"][0].reshape(T, D),
      w_z, w_cat,
      params["b_conv"], params["w_sigma"], params["w_txt"])

    return out.reshape(1, C, H, W)


# ----------------------------------------------------------------------------
# Pure-JAX reference (mirrors the PyTorch forward: repeat/cat/chunk/CFG combine)
# ----------------------------------------------------------------------------
def _reference(z, sigma, cond, uncond, ts, im, params):
    _, C, H, W = z.shape
    cfg_z = jnp.broadcast_to(z, (3, C, H, W)).reshape(3, C, H * W)
    cfg_sigma = jnp.broadcast_to(sigma.reshape(1,), (3,))
    cfg_cross = jnp.concatenate(
        [cond["c_crossattn"][0], uncond["c_crossattn"][0], uncond["c_crossattn"][0]], axis=0)
    cfg_cat = jnp.concatenate(
        [cond["c_concat"][0], cond["c_concat"][0], uncond["c_concat"][0]], axis=0).reshape(3, C, H * W)

    x = jnp.concatenate([cfg_z, cfg_cat], axis=1)                          # (3, 2C, HW)
    h = jnp.einsum("oc,ncp->nop", params["w_conv"], x)
    sig = params["w_sigma"][None, :, :] * cfg_sigma[:, None, None]
    txt = jnp.mean(cfg_cross, axis=1)                                      # (3, D)
    temb = jnp.einsum("od,nd->no", params["w_txt"], txt)[:, :, None]
    out = jnp.tanh(h + params["b_conv"][None] + sig + temb)                # (3, C, HW)
    oc, oi, ou = out[0], out[1], out[2]
    res = ou + ts * (oc - oi) + im * (oi - ou)
    return res.reshape(1, C, H, W)


if __name__ == "__main__":
    # Small shapes consistent with the forward: batch=1 (the module assumes '1 ...'),
    # channels=4, spatial=16x16, text context: seq=8, hidden=32.
    C, H, W, T, D = 4, 16, 16, 8, 32

    key = jax.random.PRNGKey(0)
    keys = jax.random.split(key, 10)

    z = jax.random.normal(keys[0], (1, C, H, W), dtype=jnp.float32)
    sigma = jnp.abs(jax.random.normal(keys[1], (1,), dtype=jnp.float32)) + 0.1
    cond = {
        "c_crossattn": [jax.random.normal(keys[2], (1, T, D), dtype=jnp.float32)],
        "c_concat": [jax.random.normal(keys[3], (1, C, H, W), dtype=jnp.float32)],
    }
    uncond = {
        "c_crossattn": [jax.random.normal(keys[4], (1, T, D), dtype=jnp.float32)],
        "c_concat": [jax.random.normal(keys[5], (1, C, H, W), dtype=jnp.float32)],
    }

    # Deterministic synthetic inner-model parameters.
    # TODO(synk): the PyTorch module wraps an arbitrary `inner_model`; a tiny synthetic
    # conditional denoiser stands in for it here.
    params = {
        "w_conv": 0.1 * jax.random.normal(keys[6], (C, 2 * C), dtype=jnp.float32),
        "b_conv": 0.1 * jax.random.normal(keys[7], (C, 1), dtype=jnp.float32),
        "w_sigma": 0.1 * jax.random.normal(keys[8], (C, 1), dtype=jnp.float32),
        "w_txt": 0.1 * jax.random.normal(keys[9], (C, D), dtype=jnp.float32),
    }

    text_cfg_scale = 7.5
    image_cfg_scale = 1.5

    out = cfg_denoiser_forward(z, sigma, cond, uncond,
                               text_cfg_scale, image_cfg_scale, params)
    out = jax.block_until_ready(out)

    ref = _reference(z, sigma, cond, uncond, text_cfg_scale, image_cfg_scale, params)
    assert out.shape == (1, C, H, W)
    assert jnp.allclose(out, ref, rtol=1e-4, atol=1e-4), "mismatch vs reference"

    print("KERNEL_OK")
</pallas_src>

<mosaic_0001>
module attributes {stable_mosaic.version = 11 : i64} {
  func.func @_fused_cfg_kernel(%arg0: memref<3xf32, #tpu.memory_space<smem>>, %arg1: memref<4x256xf32, #tpu.memory_space<vmem>>, %arg2: memref<4x256xf32, #tpu.memory_space<vmem>>, %arg3: memref<4x256xf32, #tpu.memory_space<vmem>>, %arg4: memref<8x32xf32, #tpu.memory_space<vmem>>, %arg5: memref<8x32xf32, #tpu.memory_space<vmem>>, %arg6: memref<4x4xf32, #tpu.memory_space<vmem>>, %arg7: memref<4x4xf32, #tpu.memory_space<vmem>>, %arg8: memref<4x1xf32, #tpu.memory_space<vmem>>, %arg9: memref<4x1xf32, #tpu.memory_space<vmem>>, %arg10: memref<4x32xf32, #tpu.memory_space<vmem>>, %arg11: memref<4x256xf32, #tpu.memory_space<vmem>>) attributes {dimension_semantics = [], scalar_prefetch = 0 : i64, scratch_operands = 0 : i64, tpu.core_type = #tpu.core_type<tc>} {
    %c0 = arith.constant 0 : index
    %c0_0 = arith.constant 0 : index
    %0 = vector.load %arg6[%c0, %c0_0] : memref<4x4xf32, #tpu.memory_space<vmem>>, vector<4x4xf32>
    %c0_1 = arith.constant 0 : index
    %c0_2 = arith.constant 0 : index
    %1 = vector.load %arg1[%c0_1, %c0_2] : memref<4x256xf32, #tpu.memory_space<vmem>>, vector<4x256xf32>
    %cst = arith.constant dense<0.000000e+00> : vector<4x256xf32>
    %2 = tpu.matmul %0, %1, %cst {dimension_numbers = #tpu.dot_dimension_numbers<[1], [0], [0], [1], [0, 0, 1, 1], [], []>} : vector<4x4xf32>, vector<4x256xf32>, vector<4x256xf32> -> vector<4x256xf32>
    %c0_3 = arith.constant 0 : index
    %c0_4 = arith.constant 0 : index
    %3 = vector.load %arg7[%c0_3, %c0_4] : memref<4x4xf32, #tpu.memory_space<vmem>>, vector<4x4xf32>
    %c0_5 = arith.constant 0 : index
    %c0_6 = arith.constant 0 : index
    %4 = vector.load %arg2[%c0_5, %c0_6] : memref<4x256xf32, #tpu.memory_space<vmem>>, vector<4x256xf32>
    %cst_7 = arith.constant dense<0.000000e+00> : vector<4x256xf32>
    %5 = tpu.matmul %3, %4, %cst_7 {dimension_numbers = #tpu.dot_dimension_numbers<[1], [0], [0], [1], [0, 0, 1, 1], [], []>} : vector<4x4xf32>, vector<4x256xf32>, vector<4x256xf32> -> vector<4x256xf32>
    %6 = arith.addf %2, %5 : vector<4x256xf32>
    %c0_8 = arith.constant 0 : index
    %c0_9 = arith.constant 0 : index
    %7 = vector.load %arg7[%c0_8, %c0_9] : memref<4x4xf32, #tpu.memory_space<vmem>>, vector<4x4xf32>
    %c0_10 = arith.constant 0 : index
    %c0_11 = arith.constant 0 : index
    %8 = vector.load %arg3[%c0_10, %c0_11] : memref<4x256xf32, #tpu.memory_space<vmem>>, vector<4x256xf32>
    %cst_12 = arith.constant dense<0.000000e+00> : vector<4x256xf32>
    %9 = tpu.matmul %7, %8, %cst_12 {dimension_numbers = #tpu.dot_dimension_numbers<[1], [0], [0], [1], [0, 0, 1, 1], [], []>} : vector<4x4xf32>, vector<4x256xf32>, vector<4x256xf32> -> vector<4x256xf32>
    %10 = arith.addf %2, %9 : vector<4x256xf32>
    %c0_13 = arith.constant 0 : index
    %c0_14 = arith.constant 0 : index
    %11 = vector.load %arg10[%c0_13, %c0_14] : memref<4x32xf32, #tpu.memory_space<vmem>>, vector<4x32xf32>
    %c0_15 = arith.constant 0 : index
    %c0_16 = arith.constant 0 : index
    %12 = vector.load %arg4[%c0_15, %c0_16] : memref<8x32xf32, #tpu.memory_space<vmem>>, vector<8x32xf32>
    %cst_17 = arith.constant dense<0.000000e+00> : vector<32xf32>
    %13 = vector.multi_reduction <add>, %12, %cst_17 [0] : vector<8x32xf32> to vector<32xf32>
    %14 = vector.shape_cast %13 : vector<32xf32> to vector<1x32xf32>
    %cst_18 = arith.constant 1.250000e-01 : f32
    %15 = vector.broadcast %cst_18 : f32 to vector<1x32xf32>
    %16 = arith.mulf %14, %15 : vector<1x32xf32>
    %c0_19 = arith.constant 0 : index
    %c0_20 = arith.constant 0 : index
    %17 = vector.load %arg5[%c0_19, %c0_20] : memref<8x32xf32, #tpu.memory_space<vmem>>, vector<8x32xf32>
    %cst_21 = arith.constant dense<0.000000e+00> : vector<32xf32>
    %18 = vector.multi_reduction <add>, %17, %cst_21 [0] : vector<8x32xf32> to vector<32xf32>
    %19 = vector.shape_cast %18 : vector<32xf32> to vector<1x32xf32>
    %cst_22 = arith.constant 1.250000e-01 : f32
    %20 = vector.broadcast %cst_22 : f32 to vector<1x32xf32>
    %21 = arith.mulf %19, %20 : vector<1x32xf32>
    "tpu.trace_start"() <{level = 10 : i32, message = "cd,nd->cn"}> : () -> ()
    %cst_23 = arith.constant dense<0.000000e+00> : vector<4x1xf32>
    %22 = tpu.matmul %11, %16, %cst_23 {dimension_numbers = #tpu.dot_dimension_numbers<[1], [1], [0], [0], [0, 0, 1, 0], [], []>} : vector<4x32xf32>, vector<1x32xf32>, vector<4x1xf32> -> vector<4x1xf32>
    %cst_24 = arith.constant dense<0.000000e+00> : vector<4x1xf32>
    %23 = tpu.matmul %11, %21, %cst_24 {dimension_numbers = #tpu.dot_dimension_numbers<[1], [1], [0], [0], [0, 0, 1, 0], [], []>} : vector<4x32xf32>, vector<1x32xf32>, vector<4x1xf32> -> vector<4x1xf32>
    "tpu.trace_stop"() : () -> ()
    %c0_25 = arith.constant 0 : index
    %24 = memref.load %arg0[%c0_25] : memref<3xf32, #tpu.memory_space<smem>>
    %c1 = arith.constant 1 : index
    %25 = memref.load %arg0[%c1] : memref<3xf32, #tpu.memory_space<smem>>
    %c2 = arith.constant 2 : index
    %26 = memref.load %arg0[%c2] : memref<3xf32, #tpu.memory_space<smem>>
    %c0_26 = arith.constant 0 : index
    %c0_27 = arith.constant 0 : index
    %27 = vector.load %arg8[%c0_26, %c0_27] : memref<4x1xf32, #tpu.memory_space<vmem>>, vector<4x1xf32>
    %c0_28 = arith.constant 0 : index
    %c0_29 = arith.constant 0 : index
    %28 = vector.load %arg9[%c0_28, %c0_29] : memref<4x1xf32, #tpu.memory_space<vmem>>, vector<4x1xf32>
    %29 = vector.broadcast %24 : f32 to vector<4x1xf32>
    %30 = arith.mulf %28, %29 : vector<4x1xf32>
    %31 = arith.addf %27, %30 : vector<4x1xf32>
    %32 = vector.broadcast %31 : vector<4x1xf32> to vector<4x256xf32>
    %33 = arith.addf %6, %32 : vector<4x256xf32>
    %34 = vector.broadcast %22 : vector<4x1xf32> to vector<4x256xf32>
    %35 = arith.addf %33, %34 : vector<4x256xf32>
    %36 = math.tanh %35 : vector<4x256xf32>
    %37 = vector.broadcast %31 : vector<4x1xf32> to vector<4x256xf32>
    %38 = arith.addf %6, %37 : vector<4x256xf32>
    %39 = vector.broadcast %23 : vector<4x1xf32> to vector<4x256xf32>
    %40 = arith.addf %38, %39 : vector<4x256xf32>
    %41 = math.tanh %40 : vector<4x256xf32>
    %42 = vector.broadcast %31 : vector<4x1xf32> to vector<4x256xf32>
    %43 = arith.addf %10, %42 : vector<4x256xf32>
    %44 = vector.broadcast %23 : vector<4x1xf32> to vector<4x256xf32>
    %45 = arith.addf %43, %44 : vector<4x256xf32>
    %46 = math.tanh %45 : vector<4x256xf32>
    %47 = arith.subf %36, %41 : vector<4x256xf32>
    %48 = vector.broadcast %25 : f32 to vector<4x256xf32>
    %49 = arith.mulf %48, %47 : vector<4x256xf32>
    %50 = arith.addf %46, %49 : vector<4x256xf32>
    %51 = arith.subf %41, %46 : vector<4x256xf32>
    %52 = vector.broadcast %26 : f32 to vector<4x256xf32>
    %53 = arith.mulf %52, %51 : vector<4x256xf32>
    %54 = arith.addf %50, %53 : vector<4x256xf32>
    %c0_30 = arith.constant 0 : index
    %c0_31 = arith.constant 0 : index
    %55 = vector.load %arg11[%c0_30, %c0_31] : memref<4x256xf32, #tpu.memory_space<vmem>>, vector<4x256xf32>
    tpu.vector_store %arg11[%c0_30, %c0_31], %54 {strides = array<i32>} : memref<4x256xf32, #tpu.memory_space<vmem>>, vector<4x256xf32>,
    return
  }
}

</mosaic_0001>

<llo_original>
// kernel: tpu_custom_call.1
$region0: #{tpu_custom_call.1}
  #allocation0 [shape = 'u32[]', space=smem, size = 0x4, offset = 0x4, fixed_abs, tag = 'smem constant byte address 0x4 - core index']
  #allocation1 [shape = 'u32[144,128]{1,0:T(1,128)}', space=vmem, size = 0x12000, scoped, tag = 'internal scratch']
  %s0 = inlined_call_operand.hbm [shape: f32[3], index: 0, kind: input, shape index: {}]
  %s1 = inlined_call_operand.vmem [shape: f32[4,256], index: 1, kind: input, shape index: {}]
  %s2 = inlined_call_operand.hbm [shape: f32[4,256], index: 2, kind: input, shape index: {}]
  %s3 = inlined_call_operand.hbm [shape: f32[4,256], index: 3, kind: input, shape index: {}]
  %s4 = inlined_call_operand.vmem [shape: f32[8,32], index: 4, kind: input, shape index: {}]
  %s5 = inlined_call_operand.hbm [shape: f32[8,32], index: 5, kind: input, shape index: {}]
  %s6 = inlined_call_operand.vmem [shape: f32[4,4], index: 6, kind: input, shape index: {}]
  %s7 = inlined_call_operand.hbm [shape: f32[4,4], index: 7, kind: input, shape index: {}]
  %s8 = inlined_call_operand.vmem [shape: f32[4,1], index: 8, kind: input, shape index: {}]
  %s9 = inlined_call_operand.vmem [shape: f32[4,1], index: 9, kind: input, shape index: {}]
  %s10 = inlined_call_operand.vmem [shape: f32[4,32], index: 10, kind: input, shape index: {}]
  %s11 = inlined_call_operand.hbm [shape: f32[4,256], index: 11, kind: output, shape index: {}]
  %s12 = sld [smem:[#allocation0]]
  $region74: #{tpu_custom_call.1} parent=0
    _
  %s14 = ssub.s32 1, %s12
  %s15 = scalar_select 0, %s14, %s12
  $region1: #{tpu_custom_call.1} parent=0
    #allocation2 [shape = 'u8[512]{0}', space=smem, size = 0x200, scoped, tag = 'input window, operand 0, single buffered']
    #allocation3 [shape = 's32[1]{0}', space=sflag, size = 0x4, scoped, tag = 'scoped memory for tpu_custom_call.1']
    #allocation4 [shape = 's32[1]{0}', space=sflag, size = 0x4, scoped, tag = 'scoped memory for tpu_custom_call.1']
    #allocation5 [shape = 's32[1]{0}', space=sflag, size = 0x4, scoped, tag = 'scoped memory for tpu_custom_call.1']
    #allocation6 [shape = 'u8[4096]{0}', space=vmem, size = 0x1000, scoped, tag = 'input window, operand 2, single buffered']
    #allocation7 [shape = 'u8[4096]{0}', space=vmem, size = 0x1000, scoped, tag = 'input window, operand 3, single buffered']
    #allocation8 [shape = 's32[1]{0}', space=sflag, size = 0x4, scoped, tag = 'scoped memory for tpu_custom_call.1']
    #allocation9 [shape = 'u8[4096]{0}', space=vmem, size = 0x1000, scoped, tag = 'input window, operand 5, single buffered']
    #allocation10 [shape = 'u8[2048]{0}', space=vmem, size = 0x800, scoped, tag = 'input window, operand 7, single buffered']
    #allocation11 [shape = 's32[1]{0}', space=sflag, size = 0x4, scoped, tag = 'scoped memory for tpu_custom_call.1']
    #allocation12 [shape = 'u8[4096]{0}', space=vmem, size = 0x1000, scoped, tag = 'output window, operand 0, single buffered']
    %16 = vsyncpa [#allocation5], 0
    %17 = vsyncpa [#allocation3], 0
    %18 = vsyncpa [#allocation8], 0
    %19 = vsyncpa [#allocation11], 0
    %20 = vsyncpa [#allocation4], 0
    // Predicated region
    $region2: #{tpu_custom_call.1} parent=1 // pred_check
      _
    $region3: #{tpu_custom_call.1} parent=1 // pred_check_branch
      %22 = sbr.rel (0) target = $region5
    $region4: #{tpu_custom_call.1} parent=1 // pred_region
      %s24 = ssub.s32 16, 16
      %25 = vsyncadd [#allocation5], %s24
      %28 = dma.hbm_to_smem %s0, 16, [#allocation2], [#allocation5]
    $region5: #{tpu_custom_call.1} parent=1 // pred_fallthru
      _
    // Predicated region
    $region6: #{tpu_custom_call.1} parent=1 // pred_check
      _
    $region7: #{tpu_custom_call.1} parent=1 // pred_check_branch
      %30 = sbr.rel (0) target = $region9
    $region8: #{tpu_custom_call.1} parent=1 // pred_region
      _
    $region9: #{tpu_custom_call.1} parent=1 // pred_fallthru
      _
    // Predicated region
    $region10: #{tpu_custom_call.1} parent=1 // pred_check
      _
    $region11: #{tpu_custom_call.1} parent=1 // pred_check_branch
      %32 = sbr.rel (0) target = $region13
    $region12: #{tpu_custom_call.1} parent=1 // pred_region
      %s34 = ssub.s32 128, 128
      %35 = vsyncadd [#allocation3], %s34
      %s37 = sshll.u32 [#allocation6], 4
      %s38 = int_to_ptr.vmem [resolvable:$true] %s37
      %40 = dma.hbm_to_vmem [thread:$0]  %s2, 128, %s38, [#allocation3]
    $region13: #{tpu_custom_call.1} parent=1 // pred_fallthru
      _
    // Predicated region
    $region14: #{tpu_custom_call.1} parent=1 // pred_check
      _
    $region15: #{tpu_custom_call.1} parent=1 // pred_check_branch
      %42 = sbr.rel (0) target = $region17
    $region16: #{tpu_custom_call.1} parent=1 // pred_region
      %s44 = ssub.s32 128, 128
      %45 = vsyncadd [#allocation8], %s44
      %s47 = sshll.u32 [#allocation7], 4
      %s48 = int_to_ptr.vmem [resolvable:$true] %s47
      %50 = dma.hbm_to_vmem [thread:$0]  %s3, 128, %s48, [#allocation8]
    $region17: #{tpu_custom_call.1} parent=1 // pred_fallthru
      _
    // Predicated region
    $region18: #{tpu_custom_call.1} parent=1 // pred_check
      _
    $region19: #{tpu_custom_call.1} parent=1 // pred_check_branch
      %52 = sbr.rel (0) target = $region21
    $region20: #{tpu_custom_call.1} parent=1 // pred_region
      _
    $region21: #{tpu_custom_call.1} parent=1 // pred_fallthru
      _
    // Predicated region
    $region22: #{tpu_custom_call.1} parent=1 // pred_check
      _
    $region23: #{tpu_custom_call.1} parent=1 // pred_check_branch
      %54 = sbr.rel (0) target = $region25
    $region24: #{tpu_custom_call.1} parent=1 // pred_region
      %s56 = ssub.s32 128, 128
      %57 = vsyncadd [#allocation8], %s56
      %s59 = sshll.u32 [#allocation9], 4
      %s60 = int_to_ptr.vmem [resolvable:$true] %s59
      %62 = dma.hbm_to_vmem [thread:$0]  %s5, 128, %s60, [#allocation8]
    $region25: #{tpu_custom_call.1} parent=1 // pred_fallthru
      _
    // Predicated region
    $region26: #{tpu_custom_call.1} parent=1 // pred_check
      _
    $region27: #{tpu_custom_call.1} parent=1 // pred_check_branch
      %64 = sbr.rel (0) target = $region29
    $region28: #{tpu_custom_call.1} parent=1 // pred_region
      _
    $region29: #{tpu_custom_call.1} parent=1 // pred_fallthru
      _
    // Predicated region
    $region30: #{tpu_custom_call.1} parent=1 // pred_check
      _
    $region31: #{tpu_custom_call.1} parent=1 // pred_check_branch
      %66 = sbr.rel (0) target = $region33
    $region32: #{tpu_custom_call.1} parent=1 // pred_region
      %s68 = ssub.s32 64, 64
      %69 = vsyncadd [#allocation11], %s68
      %s71 = sshll.u32 [#allocation10], 4
      %s72 = int_to_ptr.vmem [resolvable:$true] %s71
      %74 = dma.hbm_to_vmem [thread:$0]  %s7, 64, %s72, [#allocation11]
    $region33: #{tpu_custom_call.1} parent=1 // pred_fallthru
      _
    // Predicated region
    $region34: #{tpu_custom_call.1} parent=1 // pred_check
      _
    $region35: #{tpu_custom_call.1} parent=1 // pred_check_branch
      %76 = sbr.rel (0) target = $region37
    $region36: #{tpu_custom_call.1} parent=1 // pred_region
      _
    $region37: #{tpu_custom_call.1} parent=1 // pred_fallthru
      _
    // Predicated region
    $region38: #{tpu_custom_call.1} parent=1 // pred_check
      _
    $region39: #{tpu_custom_call.1} parent=1 // pred_check_branch
      %78 = sbr.rel (0) target = $region41
    $region40: #{tpu_custom_call.1} parent=1 // pred_region
      _
    $region41: #{tpu_custom_call.1} parent=1 // pred_fallthru
      _
    // Predicated region
    $region42: #{tpu_custom_call.1} parent=1 // pred_check
      _
    $region43: #{tpu_custom_call.1} parent=1 // pred_check_branch
      %80 = sbr.rel (0) target = $region45
    $region44: #{tpu_custom_call.1} parent=1 // pred_region
      _
    $region45: #{tpu_custom_call.1} parent=1 // pred_fallthru
      _
    // Predicated region
    $region46: #{tpu_custom_call.1} parent=1 // pred_check
      _
    $region47: #{tpu_custom_call.1} parent=1 // pred_check_branch
      %82 = sbr.rel (0) target = $region49
    $region48: #{tpu_custom_call.1} parent=1 // pred_region
      %83 = dma.done [#allocation5], 16
    $region49: #{tpu_custom_call.1} parent=1 // pred_fallthru
      _
    // Predicated region
    $region50: #{tpu_custom_call.1} parent=1 // pred_check
      _
    $region51: #{tpu_custom_call.1} parent=1 // pred_check_branch
      %85 = sbr.rel (0) target = $region53
    $region52: #{tpu_custom_call.1} parent=1 // pred_region
      %86 = dma.done [#allocation3], 128
    $region53: #{tpu_custom_call.1} parent=1 // pred_fallthru
      _
    // Predicated region
    $region54: #{tpu_custom_call.1} parent=1 // pred_check
      _
    $region55: #{tpu_custom_call.1} parent=1 // pred_check_branch
      %88 = sbr.rel (0) target = $region57
    $region56: #{tpu_custom_call.1} parent=1 // pred_region
      %89 = dma.done [#allocation8], 128
    $region57: #{tpu_custom_call.1} parent=1 // pred_fallthru
      _
    // Predicated region
    $region58: #{tpu_custom_call.1} parent=1 // pred_check
      _
    $region59: #{tpu_custom_call.1} parent=1 // pred_check_branch
      %91 = sbr.rel (0) target = $region61
    $region60: #{tpu_custom_call.1} parent=1 // pred_region
      %92 = dma.done [#allocation8], 128
    $region61: #{tpu_custom_call.1} parent=1 // pred_fallthru
      _
    // Predicated region
    $region62: #{tpu_custom_call.1} parent=1 // pred_check
      _
    $region63: #{tpu_custom_call.1} parent=1 // pred_check_branch
      %94 = sbr.rel (0) target = $region65
    $region64: #{tpu_custom_call.1} parent=1 // pred_region
      %95 = dma.done [#allocation11], 64
    $region65: #{tpu_custom_call.1} parent=1 // pred_fallthru
      _
    %96 = sfence
    %v97 = vld [vmem:[%s6] sm:$0xf]
    %v98 = vld [vmem:[%s1] sm:$0xff]
    %v100 = vcombine.high %v98, %v98
    %vm101 = vcmask 31744
    %v103 = vsel %vm101, %v97, 0
    %vm105 = vcmask 1043456
    %v106 = vsel %vm105, %v98, 0
    %v108 = vsel %vm105, %v100, 0
    %110 = vmatprep.subr.mxu0 0.0
    %111 = vmatpush1.msra.mxu0 0.0
    %112 = vmatprep.subr.mxu0 0.0
    %113 = vmatpush1.msra.mxu0 0.0
    %114 = vmatprep.subr.mxu0 0.0
    %115 = vmatpush1.msra.mxu0 0.0
    %116 = vmatprep.subr.mxu0 0.0
    %117 = vmatpush1.msra.mxu0 0.0
    %118 = vmatprep.subr.mxu0 0.0
    %119 = vmatpush1.msra.mxu0 0.0
    %120 = vmatprep.subr.mxu0 0.0
    %121 = vmatpush1.msra.mxu0 0.0
    %122 = vmatprep.subr.mxu0 0.0
    %123 = vmatpush1.msra.mxu0 0.0
    %124 = vmatprep.subr.mxu0 0.0
    %125 = vmatpush1.msra.mxu0 0.0
    %126 = vmatprep.subr.mxu0 0.0
    %127 = vmatpush1.msra.mxu0 0.0
    %128 = vmatprep.subr.mxu0 0.0
    %129 = vmatpush1.msra.mxu0 0.0
    %130 = vmatprep.subr.mxu0 0.0
    %131 = vmatpush1.msra.mxu0 0.0
    %132 = vmatprep.subr.mxu0 0.0
    %133 = vmatpush1.msra.mxu0 0.0
    %134 = vmatprep.subr.mxu0 0.0
    %135 = vmatpush1.msra.mxu0 0.0
    %136 = vmatprep.subr.mxu0 0.0
    %137 = vmatpush1.msra.mxu0 0.0
    %138 = vmatprep.subr.mxu0 0.0
    %139 = vmatpush1.msra.mxu0 0.0
    %140 = vmatprep.subr.mxu0 %v108
    %141 = vmatpush1.msra.mxu0 %v106
    %142 = vmatprep.subr.mxu0 0.0
    %143 = vmatpush2.msra.mxu0 0.0
    %144 = vmatprep.subr.mxu0 0.0
    %145 = vmatpush2.msra.mxu0 0.0
    %146 = vmatprep.subr.mxu0 0.0
    %147 = vmatpush2.msra.mxu0 0.0
    %148 = vmatprep.subr.mxu0 0.0
    %149 = vmatpush2.msra.mxu0 0.0
    %150 = vmatprep.subr.mxu0 0.0
    %151 = vmatpush2.msra.mxu0 0.0
    %152 = vmatprep.subr.mxu0 0.0
    %153 = vmatpush2.msra.mxu0 0.0
    %154 = vmatprep.subr.mxu0 0.0
    %155 = vmatpush2.msra.mxu0 0.0
    %156 = vmatprep.subr.mxu0 0.0
    %157 = vmatpush2.msra.mxu0 0.0
    %158 = vmatprep.subr.mxu0 0.0
    %159 = vmatpush2.msra.mxu0 0.0
    %160 = vmatprep.subr.mxu0 0.0
    %161 = vmatpush2.msra.mxu0 0.0
    %162 = vmatprep.subr.mxu0 0.0
    %163 = vmatpush2.msra.mxu0 0.0
    %164 = vmatprep.subr.mxu0 0.0
    %165 = vmatpush2.msra.mxu0 0.0
    %166 = vmatprep.subr.mxu0 0.0
    %167 = vmatpush2.msra.mxu0 0.0
    %168 = vmatprep.subr.mxu0 0.0
    %169 = vmatpush2.msra.mxu0 0.0
    %170 = vmatprep.subr.mxu0 0.0
    %171 = vmatpush2.msra.mxu0 0.0
    %172 = vmatprep.subr.mxu0 0.0
    %173 = vmatpush2.msra.mxu0 0.0
    %174 = vmatprep.mubr.f32.mxu0 0.0
    %175 = vmatmul.mubr.f32.gmra.mxu0 %v103
    %v176 = vpop.f32.mrf.mxu0
    %v177 = vadd.f32 0.0, %v176
    %v178 = vpop.f32.mrf.mxu0
    %v179 = vadd.f32 0.0, %v178
    %180 = vdwg.mxu0
    %v181 = vld [vmem:[#allocation10] sm:$0xf]
    %v182 = vld [vmem:[#allocation6] sm:$0xff]
    %v184 = vcombine.high %v182, %v182
    %v186 = vsel %vm101, %v181, 0
    %v188 = vsel %vm105, %v182, 0
    %v190 = vsel %vm105, %v184, 0
    %192 = vmatprep.subr.mxu0 0.0
    %193 = vmatpush1.msra.mxu0 0.0
    %194 = vmatprep.subr.mxu0 0.0
    %195 = vmatpush1.msra.mxu0 0.0
    %196 = vmatprep.subr.mxu0 0.0
    %197 = vmatpush1.msra.mxu0 0.0
    %198 = vmatprep.subr.mxu0 0.0
    %199 = vmatpush1.msra.mxu0 0.0
    %200 = vmatprep.subr.mxu0 0.0
    %201 = vmatpush1.msra.mxu0 0.0
    %202 = vmatprep.subr.mxu0 0.0
    %203 = vmatpush1.msra.mxu0 0.0
    %204 = vmatprep.subr.mxu0 0.0
    %205 = vmatpush1.msra.mxu0 0.0
    %206 = vmatprep.subr.mxu0 0.0
    %207 = vmatpush1.msra.mxu0 0.0
    %208 = vmatprep.subr.mxu0 0.0
    %209 = vmatpush1.msra.mxu0 0.0
    %210 = vmatprep.subr.mxu0 0.0
    %211 = vmatpush1.msra.mxu0 0.0
    %212 = vmatprep.subr.mxu0 0.0
    %213 = vmatpush1.msra.mxu0 0.0
    %214 = vmatprep.subr.mxu0 0.0
    %215 = vmatpush1.msra.mxu0 0.0
    %216 = vmatprep.subr.mxu0 0.0
    %217 = vmatpush1.msra.mxu0 0.0
    %218 = vmatprep.subr.mxu0 0.0
    %219 = vmatpush1.msra.mxu0 0.0
    %220 = vmatprep.subr.mxu0 0.0
    %221 = vmatpush1.msra.mxu0 0.0
    %222 = vmatprep.subr.mxu0 %v190
    %223 = vmatpush1.msra.mxu0 %v188
    %224 = vmatprep.subr.mxu0 0.0
    %225 = vmatpush2.msra.mxu0 0.0
    %226 = vmatprep.subr.mxu0 0.0
    %227 = vmatpush2.msra.mxu0 0.0
    %228 = vmatprep.subr.mxu0 0.0
    %229 = vmatpush2.msra.mxu0 0.0
    %230 = vmatprep.subr.mxu0 0.0
    %231 = vmatpush2.msra.mxu0 0.0
    %232 = vmatprep.subr.mxu0 0.0
    %233 = vmatpush2.msra.mxu0 0.0
    %234 = vmatprep.subr.mxu0 0.0
    %235 = vmatpush2.msra.mxu0 0.0
    %236 = vmatprep.subr.mxu0 0.0
    %237 = vmatpush2.msra.mxu0 0.0
    %238 = vmatprep.subr.mxu0 0.0
    %239 = vmatpush2.msra.mxu0 0.0
    %240 = vmatprep.subr.mxu0 0.0
    %241 = vmatpush2.msra.mxu0 0.0
    %242 = vmatprep.subr.mxu0 0.0
    %243 = vmatpush2.msra.mxu0 0.0
    %244 = vmatprep.subr.mxu0 0.0
    %245 = vmatpush2.msra.mxu0 0.0
    %246 = vmatprep.subr.mxu0 0.0
    %247 = vmatpush2.msra.mxu0 0.0
    %248 = vmatprep.subr.mxu0 0.0
    %249 = vmatpush2.msra.mxu0 0.0
    %250 = vmatprep.subr.mxu0 0.0
    %251 = vmatpush2.msra.mxu0 0.0
    %252 = vmatprep.subr.mxu0 0.0
    %253 = vmatpush2.msra.mxu0 0.0
    %254 = vmatprep.subr.mxu0 0.0
    %255 = vmatpush2.msra.mxu0 0.0
    %256 = vmatprep.mubr.f32.mxu0 0.0
    %257 = vmatmul.mubr.f32.gmra.mxu0 %v186
    %v258 = vpop.f32.mrf.mxu0
    %v259 = vadd.f32 0.0, %v258
    %v260 = vpop.f32.mrf.mxu0
    %v261 = vadd.f32 0.0, %v260
    %262 = vdwg.mxu0
    %v263 = vadd.f32 %v177, %v259
    %v264 = vadd.f32 %v179, %v261
    %v265 = vld [vmem:[#allocation7] sm:$0xff]
    %v267 = vcombine.high %v265, %v265
    %v268 = vsel %vm105, %v265, 0
    %v270 = vsel %vm105, %v267, 0
    %272 = vmatprep.subr.mxu0 0.0
    %273 = vmatpush1.msra.mxu0 0.0
    %274 = vmatprep.subr.mxu0 0.0
    %275 = vmatpush1.msra.mxu0 0.0
    %276 = vmatprep.subr.mxu0 0.0
    %277 = vmatpush1.msra.mxu0 0.0
    %278 = vmatprep.subr.mxu0 0.0
    %279 = vmatpush1.msra.mxu0 0.0
    %280 = vmatprep.subr.mxu0 0.0
    %281 = vmatpush1.msra.mxu0 0.0
    %282 = vmatprep.subr.mxu0 0.0
    %283 = vmatpush1.msra.mxu0 0.0
    %284 = vmatprep.subr.mxu0 0.0
    %285 = vmatpush1.msra.mxu0 0.0
    %286 = vmatprep.subr.mxu0 0.0
    %287 = vmatpush1.msra.mxu0 0.0
    %288 = vmatprep.subr.mxu0 0.0
    %289 = vmatpush1.msra.mxu0 0.0
    %290 = vmatprep.subr.mxu0 0.0
    %291 = vmatpush1.msra.mxu0 0.0
    %292 = vmatprep.subr.mxu0 0.0
    %293 = vmatpush1.msra.mxu0 0.0
    %294 = vmatprep.subr.mxu0 0.0
    %295 = vmatpush1.msra.mxu0 0.0
    %296 = vmatprep.subr.mxu0 0.0
    %297 = vmatpush1.msra.mxu0 0.0
    %298 = vmatprep.subr.mxu0 0.0
    %299 = vmatpush1.msra.mxu0 0.0
    %300 = vmatprep.subr.mxu0 0.0
    %301 = vmatpush1.msra.mxu0 0.0
    %302 = vmatprep.subr.mxu0 %v270
    %303 = vmatpush1.msra.mxu0 %v268
    %304 = vmatprep.subr.mxu0 0.0
    %305 = vmatpush2.msra.mxu0 0.0
    %306 = vmatprep.subr.mxu0 0.0
    %307 = vmatpush2.msra.mxu0 0.0
    %308 = vmatprep.subr.mxu0 0.0
    %309 = vmatpush2.msra.mxu0 0.0
    %310 = vmatprep.subr.mxu0 0.0
    %311 = vmatpush2.msra.mxu0 0.0
    %312 = vmatprep.subr.mxu0 0.0
    %313 = vmatpush2.msra.mxu0 0.0
    %314 = vmatprep.subr.mxu0 0.0
    %315 = vmatpush2.msra.mxu0 0.0
    %316 = vmatprep.subr.mxu0 0.0
    %317 = vmatpush2.msra.mxu0 0.0
    %318 = vmatprep.subr.mxu0 0.0
    %319 = vmatpush2.msra.mxu0 0.0
    %320 = vmatprep.subr.mxu0 0.0
    %321 = vmatpush2.msra.mxu0 0.0
    %322 = vmatprep.subr.mxu0 0.0
    %323 = vmatpush2.msra.mxu0 0.0
    %324 = vmatprep.subr.mxu0 0.0
    %325 = vmatpush2.msra.mxu0 0.0
    %326 = vmatprep.subr.mxu0 0.0
    %327 = vmatpush2.msra.mxu0 0.0
    %328 = vmatprep.subr.mxu0 0.0
    %329 = vmatpush2.msra.mxu0 0.0
    %330 = vmatprep.subr.mxu0 0.0
    %331 = vmatpush2.msra.mxu0 0.0
    %332 = vmatprep.subr.mxu0 0.0
    %333 = vmatpush2.msra.mxu0 0.0
    %334 = vmatprep.subr.mxu0 0.0
    %335 = vmatpush2.msra.mxu0 0.0
    %336 = vmatprep.mubr.f32.mxu0 0.0
    %337 = vmatmul.mubr.f32.gmra.mxu0 %v186
    %v338 = vpop.f32.mrf.mxu0
    %v339 = vadd.f32 0.0, %v338
    %v340 = vpop.f32.mrf.mxu0
    %v341 = vadd.f32 0.0, %v340
    %342 = vdwg.mxu0
    %v343 = vadd.f32 %v177, %v339
    %v344 = vadd.f32 %v179, %v341
    %v345 = vld [vmem:[%s10] sm:$0xf]
    %v346 = vld [vmem:[%s4] sm:$0xff]
    %vm347 = vcmask 261120
    %v348 = vsel %vm347, %v346, 0.0
    %v349 = vrot.slane %v348, 4
    %v350 = vadd.f32 %v348, %v349
    %v351 = vrot.slane %v350, 2
    %v352 = vadd.f32 %v350, %v351
    %v353 = vrot.slane %v352, 1
    %v354 = vadd.f32 %v352, %v353
    %v355 = vmul.f32 %v354, 0.125
    %v356 = vld [vmem:[#allocation9] sm:$0xff]
    %v357 = vsel %vm347, %v356, 0.0
    %v358 = vrot.slane %v357, 4
    %v359 = vadd.f32 %v357, %v358
    %v360 = vrot.slane %v359, 2
    %v361 = vadd.f32 %v359, %v360
    %v362 = vrot.slane %v361, 1
    %v363 = vadd.f32 %v361, %v362
    %v364 = vmul.f32 %v363, 0.125
    %v365 = vmul.f32 %v345, %v355
    %vm366 = vcmask 257024
    %v367 = vsel %vm366, %v365, 0.0
    %368 = vadd.xlane.f32.xlu0 %v367
    %v369 = vpop.xlane.xlu0 %368
    %v370 = vmul.f32 %v345, %v364
    %v371 = vsel %vm366, %v370, 0.0
    %372 = vadd.xlane.f32.xlu0 %v371
    %v373 = vpop.xlane.xlu0 %372
    %s374 = sld [smem:[#allocation2]]
    %s375 = sld [smem:[#allocation2 + $0x1]]
    %s376 = sld [smem:[#allocation2 + $0x2]]
    %v377 = vld [vmem:[%s8] sm:$0xf]
    %v378 = vld [vmem:[%s9] sm:$0xf]
    %v379 = vstv %s374
    %v380 = vmul.f32 %v378, %v379
    %v381 = vadd.f32 %v377, %v380
    %383 = vset.pattern.permute.xlu0 0
    %384 = vperm.xlu0 %383, %v381
    %v385 = vpop.permute.xlu0 %384
    %v387 = vadd.f32 %v263, %v385
    %v388 = vadd.f32 %v264, %v385
    %v389 = vadd.f32 %v387, %v369
    %v390 = vadd.f32 %v388, %v369
    %v391 = vtanh.pop %v389
    %v392 = vtanh.pop %v390
    %v393 = vadd.f32 %v387, %v373
    %v394 = vadd.f32 %v388, %v373
    %v395 = vtanh.pop %v393
    %v396 = vtanh.pop %v394
    %v397 = vadd.f32 %v343, %v385
    %v398 = vadd.f32 %v344, %v385
    %v399 = vadd.f32 %v397, %v373
    %v400 = vadd.f32 %v398, %v373
    %v401 = vtanh.pop %v399
    %v402 = vtanh.pop %v400
    %v403 = vsub.f32 %v391, %v395
    %v404 = vsub.f32 %v392, %v396
    %v405 = vstv %s375
    %v406 = vmul.f32 %v405, %v403
    %v407 = vmul.f32 %v405, %v404
    %v408 = vadd.f32 %v401, %v406
    %v409 = vadd.f32 %v402, %v407
    %v410 = vsub.f32 %v395, %v401
    %v411 = vsub.f32 %v396, %v402
    %v412 = vstv %s376
    %v413 = vmul.f32 %v412, %v410
    %v414 = vmul.f32 %v412, %v411
    %v415 = vadd.f32 %v408, %v413
    %v416 = vadd.f32 %v409, %v414
    %v419 = vcombine.low %v415, %v416
    %421 = vst [vmem:[#allocation12] sm:$0xff] %v419
    // Predicated region
    $region66: #{tpu_custom_call.1} parent=1 // pred_check
      _
    $region67: #{tpu_custom_call.1} parent=1 // pred_check_branch
      %423 = sbr.rel (0) target = $region69
    $region68: #{tpu_custom_call.1} parent=1 // pred_region
      %s425 = ssub.s32 128, 128
      %426 = vsyncadd [#allocation4], %s425
      %s428 = sshll.u32 [#allocation12], 4
      %s429 = int_to_ptr.vmem [resolvable:$true] %s428
      %431 = dma.vmem_to_hbm [thread:$0]  %s429, 128, %s11, [#allocation4]
    $region69: #{tpu_custom_call.1} parent=1 // pred_fallthru
      _
    // Predicated region
    $region70: #{tpu_custom_call.1} parent=1 // pred_check
      _
    $region71: #{tpu_custom_call.1} parent=1 // pred_check_branch
      %433 = sbr.rel (0) target = $region73
    $region72: #{tpu_custom_call.1} parent=1 // pred_region
      %434 = dma.done [#allocation4], 128
    $region73: #{tpu_custom_call.1} parent=1 // pred_fallthru
      _
    %435 = vsyncpa [#allocation3], 1
    %436 = vsyncpa [#allocation8], 1
    %437 = vsyncpa [#allocation11], 1
    %438 = vsyncpa [#allocation4], 1
    %439 = vsyncpa [#allocation5], 1

</llo_original>
